<compile_context>
chip_gen: v7x
topology: tpu7x:2x2x1
jax: 0.10.0
libtpu: 0.0.40
codegen_flags: <defaults>
</compile_context>

<pallas_src>
import jax
import jax.numpy as jnp
from jax import lax
from jax.experimental import pallas as pl
from jax.experimental.pallas import tpu as pltpu


def _ffn_kernel(x_ref, w1_ref, b1_ref, w2_ref, b2_ref, o_ref, acc_ref):
    """One (token tile, hidden chunk) grid step of the fused MLP.

    x_ref  : (TM, dim)      token tile (resident across the hidden axis)
    w1_ref : (dim, TK)      first-linear weight chunk (in, out)
    b1_ref : (1, TK)
    w2_ref : (TK, dim)      second-linear weight chunk (in, out)
    b2_ref : (1, dim)
    o_ref  : (TM, dim)
    acc_ref: (TM, dim) f32  accumulator scratch across hidden chunks
    """
    k = pl.program_id(1)

    @pl.when(k == 0)
    def _():
        acc_ref[...] = jnp.zeros_like(acc_ref)

    # ---- Linear 1 chunk: single MXU matmul, f32 accumulate ----
    h = jnp.dot(x_ref[...], w1_ref[...], preferred_element_type=jnp.float32)
    h = h + b1_ref[...].astype(jnp.float32)

    # ---- SiLU in f32 (exp lives in the EUP slot, multiply on the VPU) ----
    h = h * jax.nn.sigmoid(h)

    # ---- Linear 2 partial product, accumulated into the f32 scratch ----
    h = h.astype(w2_ref.dtype)
    acc_ref[...] += jnp.dot(h, w2_ref[...], preferred_element_type=jnp.float32)

    @pl.when(k == pl.num_programs(1) - 1)
    def _():
        o = acc_ref[...] + b2_ref[...].astype(jnp.float32)
        o_ref[...] = o.astype(o_ref.dtype)


def _pick_block_tokens(M, itemsize):
    """Largest lane-friendly token tile; prefers >=2 even grid steps (v7x)."""
    min_rows = max(8, 32 // max(1, itemsize))          # f32:8, bf16:16, int8:32
    candidates = [c for c in (1024, 768, 512, 256, 128, 64, 32, 16, 8)
                  if c >= min_rows]
    # 1) divides M, >=2 steps, even step count (both v7x TCs busy every step)
    for c in candidates:
        if M % c == 0 and (M // c) >= 2 and (M // c) % 2 == 0:
            return c
    # 2) divides M, >=2 steps
    for c in candidates:
        if M % c == 0 and (M // c) >= 2:
            return c
    # 3) single-step fallback (full-dims exception)
    return M


def _pick_hidden_block(mlp_dim):
    """Hidden-axis chunk of ~512-1024 so intermediates stay O(TM x TK)."""
    for c in (1024, 512, 256, 128):
        if mlp_dim % c == 0:
            return c
    return mlp_dim


def feedforward_pallas(x, w1, b1, w2, b2, *, block_tokens=None,
                       hidden_block=None, compute_dtype=jnp.bfloat16):
    """x: (..., dim); w1: (dim, mlp_dim); b1: (mlp_dim,); w2: (mlp_dim, dim);
    b2: (dim,).  Dropout is identity (inference)."""
    orig_shape = x.shape
    out_dtype = x.dtype
    dim = orig_shape[-1]
    mlp_dim = w1.shape[1]

    # Lane-dense flatten; MXU operands in bf16 (f32 accumulation in-kernel).
    x2 = x.reshape(-1, dim).astype(compute_dtype)
    w1c = w1.astype(compute_dtype)
    w2c = w2.astype(compute_dtype)
    b1c = b1.reshape(1, mlp_dim).astype(jnp.float32)
    b2c = b2.reshape(1, dim).astype(jnp.float32)
    M = x2.shape[0]

    itemsize = jnp.dtype(compute_dtype).itemsize
    if block_tokens is None:
        block_tokens = _pick_block_tokens(M, itemsize)
    assert M % block_tokens == 0, "token count must be divisible by tile size"
    if hidden_block is None:
        hidden_block = _pick_hidden_block(mlp_dim)
    assert mlp_dim % hidden_block == 0, "mlp_dim must be divisible by chunk"

    n_tok = M // block_tokens
    n_hid = mlp_dim // hidden_block
    grid = (n_tok, n_hid)

    # Blocks whose index never changes need only one buffer.
    single = pl.Buffered(1)

    def _weight_spec(shape, index_map):
        if n_hid == 1:
            return pl.BlockSpec(shape, index_map, pipeline_mode=single)
        return pl.BlockSpec(shape, index_map)          # default double-buffer

    # ---- explicit VMEM budget (review: v7x has 64 MiB physical; default
    # scoped limit is only 16/32 MiB) ----
    f32 = 4
    nb = 1 if n_hid == 1 else 2
    need = 0
    need += 2 * block_tokens * dim * itemsize                        # x tile
    need += 2 * block_tokens * dim * jnp.dtype(out_dtype).itemsize   # out tile
    need += nb * dim * hidden_block * itemsize                       # W1 chunk
    need += nb * hidden_block * dim * itemsize                       # W2 chunk
    need += nb * 8 * max(hidden_block, 128) * f32                    # b1 (padded)
    need += 8 * max(dim, 128) * f32                                  # b2 (padded)
    need += block_tokens * dim * f32                                 # acc scratch
    need += 2 * block_tokens * hidden_block * f32                    # live h chunk
    vmem_limit = int(min(max(need * 5 // 4 + (4 << 20), 16 << 20), 64 << 20))

    out = pl.pallas_call(
        _ffn_kernel,
        out_shape=jax.ShapeDtypeStruct((M, dim), out_dtype),
        grid_spec=pltpu.PrefetchScalarGridSpec(
            num_scalar_prefetch=0,
            grid=grid,
            in_specs=[
                pl.BlockSpec((block_tokens, dim), lambda i, k: (i, 0)),
                _weight_spec((dim, hidden_block), lambda i, k: (0, k)),
                _weight_spec((1, hidden_block), lambda i, k: (0, k)),
                _weight_spec((hidden_block, dim), lambda i, k: (k, 0)),
                pl.BlockSpec((1, dim), lambda i, k: (0, 0),
                             pipeline_mode=single),
            ],
            out_specs=pl.BlockSpec((block_tokens, dim), lambda i, k: (i, 0)),
            scratch_shapes=[pltpu.VMEM((block_tokens, dim), jnp.float32)],
        ),
        compiler_params=pltpu.CompilerParams(
            dimension_semantics=("parallel", "arbitrary"),
            vmem_limit_bytes=vmem_limit,
        ),
    )(x2, w1c, b1c, w2c, b2c)

    return out.reshape(orig_shape)


def feedforward_reference(x, w1, b1, w2, b2):
    """Plain-JAX f32 reference (dropout = identity)."""
    h = jnp.dot(x.astype(jnp.float32), w1.astype(jnp.float32),
                precision=lax.Precision.HIGHEST) + b1.astype(jnp.float32)
    h = h * jax.nn.sigmoid(h)
    o = jnp.dot(h, w2.astype(jnp.float32),
                precision=lax.Precision.HIGHEST) + b2.astype(jnp.float32)
    return o.astype(x.dtype)


if __name__ == "__main__":
    # Small shapes consistent with the module: batch=2, seq=64, dim=128,
    # mlp_dim=256 (lane-dense: dim / mlp_dim multiples of 128).
    B, S, DIM, MLP = 2, 64, 128, 256

    key = jax.random.PRNGKey(0)
    kx, kw1, kb1, kw2, kb2 = jax.random.split(key, 5)

    x = jax.random.normal(kx, (B, S, DIM), dtype=jnp.float32)

    # PyTorch Linear weights are (out, in); generated directly in (in, out).
    w1 = jax.random.normal(kw1, (DIM, MLP), dtype=jnp.float32) * 0.05
    b1 = jax.random.normal(kb1, (MLP,), dtype=jnp.float32) * 0.05
    w2 = jax.random.normal(kw2, (MLP, DIM), dtype=jnp.float32) * 0.05
    b2 = jax.random.normal(kb2, (DIM,), dtype=jnp.float32) * 0.05

    ref = feedforward_reference(x, w1, b1, w2, b2)

    # Default path (single hidden chunk, single-buffered weights).
    out = feedforward_pallas(x, w1, b1, w2, b2)
    out = jax.block_until_ready(out)
    assert out.shape == (B, S, DIM)
    err = float(jnp.max(jnp.abs(out - ref)))
    assert err < 2e-2, f"mismatch vs reference (default path): {err}"

    # Force multiple hidden chunks to exercise the accumulator grid axis.
    out2 = feedforward_pallas(x, w1, b1, w2, b2,
                              block_tokens=64, hidden_block=128)
    out2 = jax.block_until_ready(out2)
    err2 = float(jnp.max(jnp.abs(out2 - ref)))
    assert err2 < 2e-2, f"mismatch vs reference (tiled-hidden path): {err2}"

    print("KERNEL_OK")
</pallas_src>

<mosaic_0001>
module attributes {stable_mosaic.version = 11 : i64} {
  func.func @_ffn_kernel(%arg0: i32, %arg1: i32, %arg2: memref<64x128xbf16, #tpu.memory_space<vmem>>, %arg3: memref<128x256xbf16, #tpu.memory_space<vmem>>, %arg4: memref<1x256xf32, #tpu.memory_space<vmem>>, %arg5: memref<256x128xbf16, #tpu.memory_space<vmem>>, %arg6: memref<1x128xf32, #tpu.memory_space<vmem>>, %arg7: memref<64x128xf32, #tpu.memory_space<vmem>>, %arg8: memref<64x128xf32, #tpu.memory_space<vmem>>) attributes {dimension_semantics = [#tpu.dimension_semantics<parallel>, #tpu.dimension_semantics<arbitrary>], iteration_bounds = array<i64: 2, 1>, scalar_prefetch = 0 : i64, scratch_operands = 1 : i64, tpu.core_type = #tpu.core_type<tc>, window_params = [{transform_indices = @transform_0, window_bounds = array<i64: 64, 128>}, {pipeline_mode = #tpu.pipeline_mode<synchronous>, transform_indices = @transform_1, window_bounds = array<i64: 128, 256>}, {pipeline_mode = #tpu.pipeline_mode<synchronous>, transform_indices = @transform_2, window_bounds = array<i64: 1, 256>}, {pipeline_mode = #tpu.pipeline_mode<synchronous>, transform_indices = @transform_3, window_bounds = array<i64: 256, 128>}, {pipeline_mode = #tpu.pipeline_mode<synchronous>, transform_indices = @transform_4, window_bounds = array<i64: 1, 128>}, {transform_indices = @transform_5, window_bounds = array<i64: 64, 128>}]} {
    %c0_i32 = arith.constant 0 : i32
    %0 = arith.cmpi eq, %arg1, %c0_i32 : i32
    %1 = arith.extui %0 : i1 to i32
    %c0_i32_0 = arith.constant 0 : i32
    %2 = arith.cmpi ne, %1, %c0_i32_0 : i32
    scf.if %2 {
      %cst_16 = arith.constant 0.000000e+00 : f32
      %24 = vector.broadcast %cst_16 : f32 to vector<64x128xf32>
      %c0_17 = arith.constant 0 : index
      %c0_18 = arith.constant 0 : index
      %25 = vector.load %arg8[%c0_17, %c0_18] : memref<64x128xf32, #tpu.memory_space<vmem>>, vector<64x128xf32>
      tpu.vector_store %arg8[%c0_17, %c0_18], %24 {strides = array<i32>} : memref<64x128xf32, #tpu.memory_space<vmem>>, vector<64x128xf32>,
    } else {
    }
    %c0 = arith.constant 0 : index
    %c0_1 = arith.constant 0 : index
    %3 = vector.load %arg2[%c0, %c0_1] : memref<64x128xbf16, #tpu.memory_space<vmem>>, vector<64x128xbf16>
    %c0_2 = arith.constant 0 : index
    %c0_3 = arith.constant 0 : index
    %4 = vector.load %arg3[%c0_2, %c0_3] : memref<128x256xbf16, #tpu.memory_space<vmem>>, vector<128x256xbf16>
    %cst = arith.constant dense<0.000000e+00> : vector<64x256xf32>
    %5 = tpu.matmul %3, %4, %cst {dimension_numbers = #tpu.dot_dimension_numbers<[1], [0], [0], [1], [0, 0, 1, 1], [], []>} : vector<64x128xbf16>, vector<128x256xbf16>, vector<64x256xf32> -> vector<64x256xf32>
    %c0_4 = arith.constant 0 : index
    %c0_5 = arith.constant 0 : index
    %6 = vector.load %arg4[%c0_4, %c0_5] : memref<1x256xf32, #tpu.memory_space<vmem>>, vector<1x256xf32>
    %7 = vector.broadcast %6 : vector<1x256xf32> to vector<64x256xf32>
    %8 = arith.addf %5, %7 : vector<64x256xf32>
    %9 = arith.negf %8 : vector<64x256xf32>
    %10 = math.exp %9 : vector<64x256xf32>
    %cst_6 = arith.constant 1.000000e+00 : f32
    %11 = vector.broadcast %cst_6 : f32 to vector<64x256xf32>
    %12 = arith.addf %11, %10 : vector<64x256xf32>
    %13 = arith.divf %11, %12 : vector<64x256xf32>
    %14 = arith.mulf %8, %13 : vector<64x256xf32>
    %15 = arith.truncf %14 : vector<64x256xf32> to vector<64x256xbf16>
    %c0_7 = arith.constant 0 : index
    %c0_8 = arith.constant 0 : index
    %16 = vector.load %arg8[%c0_7, %c0_8] : memref<64x128xf32, #tpu.memory_space<vmem>>, vector<64x128xf32>
    %c0_9 = arith.constant 0 : index
    %c0_10 = arith.constant 0 : index
    %17 = vector.load %arg5[%c0_9, %c0_10] : memref<256x128xbf16, #tpu.memory_space<vmem>>, vector<256x128xbf16>
    %cst_11 = arith.constant dense<0.000000e+00> : vector<64x128xf32>
    %18 = tpu.matmul %15, %17, %cst_11 {dimension_numbers = #tpu.dot_dimension_numbers<[1], [0], [0], [1], [0, 0, 1, 1], [], []>} : vector<64x256xbf16>, vector<256x128xbf16>, vector<64x128xf32> -> vector<64x128xf32>
    %19 = arith.addf %16, %18 : vector<64x128xf32>
    %c0_12 = arith.constant 0 : index
    %c0_13 = arith.constant 0 : index
    %20 = vector.load %arg8[%c0_12, %c0_13] : memref<64x128xf32, #tpu.memory_space<vmem>>, vector<64x128xf32>
    tpu.vector_store %arg8[%c0_12, %c0_13], %19 {strides = array<i32>} : memref<64x128xf32, #tpu.memory_space<vmem>>, vector<64x128xf32>,
    %c0_i32_14 = arith.constant 0 : i32
    %21 = arith.cmpi eq, %arg1, %c0_i32_14 : i32
    %22 = arith.extui %21 : i1 to i32
    %c0_i32_15 = arith.constant 0 : i32
    %23 = arith.cmpi ne, %22, %c0_i32_15 : i32
    scf.if %23 {
      %c0_16 = arith.constant 0 : index
      %c0_17 = arith.constant 0 : index
      %24 = vector.load %arg8[%c0_16, %c0_17] : memref<64x128xf32, #tpu.memory_space<vmem>>, vector<64x128xf32>
      %c0_18 = arith.constant 0 : index
      %c0_19 = arith.constant 0 : index
      %25 = vector.load %arg6[%c0_18, %c0_19] : memref<1x128xf32, #tpu.memory_space<vmem>>, vector<1x128xf32>
      %26 = vector.broadcast %25 : vector<1x128xf32> to vector<64x128xf32>
      %27 = arith.addf %24, %26 : vector<64x128xf32>
      %c0_20 = arith.constant 0 : index
      %c0_21 = arith.constant 0 : index
      %28 = vector.load %arg7[%c0_20, %c0_21] : memref<64x128xf32, #tpu.memory_space<vmem>>, vector<64x128xf32>
      tpu.vector_store %arg7[%c0_20, %c0_21], %27 {strides = array<i32>} : memref<64x128xf32, #tpu.memory_space<vmem>>, vector<64x128xf32>,
    } else {
    }
    return
  }
  func.func @transform_0(%arg0: i32, %arg1: i32) -> (i32, i32) {
    %c0_i32 = arith.constant 0 : i32
    %c0_i32_0 = arith.constant 0 : i32
    return %arg0, %c0_i32 : i32, i32
  }
  func.func @transform_1(%arg0: i32, %arg1: i32) -> (i32, i32) {
    %c0_i32 = arith.constant 0 : i32
    %c0_i32_0 = arith.constant 0 : i32
    return %c0_i32, %arg1 : i32, i32
  }
  func.func @transform_2(%arg0: i32, %arg1: i32) -> (i32, i32) {
    %c0_i32 = arith.constant 0 : i32
    %c0_i32_0 = arith.constant 0 : i32
    return %c0_i32, %arg1 : i32, i32
  }
  func.func @transform_3(%arg0: i32, %arg1: i32) -> (i32, i32) {
    %c0_i32 = arith.constant 0 : i32
    %c0_i32_0 = arith.constant 0 : i32
    return %arg1, %c0_i32 : i32, i32
  }
  func.func @transform_4(%arg0: i32, %arg1: i32) -> (i32, i32) {
    %c0_i32 = arith.constant 0 : i32
    %c0_i32_0 = arith.constant 0 : i32
    %c0_i32_1 = arith.constant 0 : i32
    return %c0_i32, %c0_i32_0 : i32, i32
  }
  func.func @transform_5(%arg0: i32, %arg1: i32) -> (i32, i32) {
    %c0_i32 = arith.constant 0 : i32
    %c0_i32_0 = arith.constant 0 : i32
    return %arg0, %c0_i32 : i32, i32
  }
}

</mosaic_0001>

<llo_original>
// kernel: tpu_custom_call.1
$region0: #{tpu_custom_call.1}
  #allocation0 [shape = 'u32[]', space=smem, size = 0x4, offset = 0x4, fixed_abs, tag = 'smem constant byte address 0x4 - core index']
  #allocation1 [shape = 'u32[144,128]{1,0:T(1,128)}', space=vmem, size = 0x12000, scoped, tag = 'internal scratch']
  #allocation2 [shape = 'f32[64,128]{1,0:T(8,128)}', space=vmem, size = 0x8000, scoped, tag = 'scratch operand']
  %s0 = inlined_call_operand.hbm [shape: bf16[128,128], index: 0, kind: input, shape index: {}]
  %s1 = inlined_call_operand.hbm [shape: bf16[128,256], index: 1, kind: input, shape index: {}]
  %s2 = inlined_call_operand.vmem [shape: f32[1,256], index: 2, kind: input, shape index: {}]
  %s3 = inlined_call_operand.hbm [shape: bf16[256,128], index: 3, kind: input, shape index: {}]
  %s4 = inlined_call_operand.vmem [shape: f32[1,128], index: 4, kind: input, shape index: {}]
  %s5 = inlined_call_operand.hbm [shape: f32[128,128], index: 5, kind: output, shape index: {}]
  %s6 = sld [smem:[#allocation0]]
  $region73: #{tpu_custom_call.1} parent=0
    _
  %s8 = ssub.s32 1, %s6
  %s9 = scalar_select 0, %s8, %s6
  $region1: #{tpu_custom_call.1} parent=0
    #allocation3 [shape = 'u8[32768]{0}', space=vmem, size = 0x8000, scoped, tag = 'input window, operand 0']
    #allocation4 [shape = 's32[2]{0}', space=sflag, size = 0x8, scoped, tag = 'scoped memory for tpu_custom_call.1']
    #allocation5 [shape = 's32[2]{0}', space=sflag, size = 0x8, scoped, tag = 'scoped memory for tpu_custom_call.1']
    #allocation6 [shape = 'u8[65536]{0}', space=vmem, size = 0x10000, scoped, tag = 'input window, operand 1, single buffered']
    #allocation7 [shape = 's32[1]{0}', space=sflag, size = 0x4, scoped, tag = 'scoped memory for tpu_custom_call.1']
    #allocation8 [shape = 'u8[65536]{0}', space=vmem, size = 0x10000, scoped, tag = 'input window, operand 3, single buffered']
    #allocation9 [shape = 'u8[65536]{0}', space=vmem, size = 0x10000, scoped, tag = 'output window, operand 0']
    %10 = vsyncpa [#allocation4], 0
    %s11 = scalar_lea.sflag [#allocation4], 1
    %12 = vsyncpa %s11, 0
    %13 = vsyncpa [#allocation7], 0
    %14 = vsyncpa [#allocation5], 0
    %s15 = scalar_lea.sflag [#allocation5], 1
    %16 = vsyncpa %s15, 0
    loop: start=0, step=1, limit=4
    $region2: #{tpu_custom_call.1} parent=1 // loop_pre_header
      _
    $region3: #{tpu_custom_call.1} parent=1 // loop_header
      %s18 = sphi 0, %s22
      %p19 = scmp.ge.s32.totalorder %s18, 4
      %s25 = sphi 0, %s37
      %s26 = sphi 0, %s33
      %s27 = sphi 0, %s25
      %s28 = sphi 0, %s26
      %s29 = sphi 0, %s27
      %s30 = sphi 0, %s28
      %s40 = sphi 0, %s42
      %s43 = sphi 0, %s40
      %s44 = sphi 0, %s43
      %s60 = sphi 0, %s44
      %s66 = sphi 0, %s68
      %s69 = sphi 0, %s66
      %s70 = sphi 0, %s69
      %s86 = sphi 0, %s70
      %s92 = sphi 0, %s94
      %s95 = sphi 0, %s92
      %s96 = sphi 0, %s95
      %s112 = sphi 0, %s96
      %s118 = sphi 0, %s120
      %s121 = sphi 0, %s118
      %s122 = sphi 0, %s121
      %s138 = sphi 0, %s122
      %s142 = sphi 0, %s142
      %s144 = sphi 0, %s142
      %s145 = sphi 0, %s144
      %s159 = sphi 0, %s145
      %s165 = sphi 0, %s167
      %s168 = sphi 0, %s165
      %s169 = sphi 0, %s168
      %s185 = sphi 0, %s169
    $region4: #{tpu_custom_call.1} parent=1 // loop_header_branch
      %21 = sbr.rel (%p19) target = $region8
    $region5: #{tpu_custom_call.1} parent=1 // loop_body
      %s23 = ssub.s32 %s18, 1
      %s24 = ssub.s32 %s18, 2
      %s31 = sadd.s32 1, %s26
      %p32 = scmp.ge.s32.totalorder %s31, 1
      %s33 = scalar_select %p32, 0, %s31
      %s34 = sadd.s32 1, %s25
      %s35 = scalar_select %p32, %s34, %s25
      %p36 = scmp.ge.s32.totalorder %s35, 2
      %s37 = scalar_select %p36, 0, %s35
      %s38 = ssub.s32 %s25, %s37
      %p39 = scmp.eq.s32.totalorder %s38, 0
      %s41 = sadd.s32 %s40, 1
      %s42 = scalar_select %p39, %s40, %s41
      %p45 = pneg %p39
      %p46 = scmp.eq.s32.totalorder %s18, 1
      %p47 = por %p45, %p46
      %p48 = scmp.ne.s32.totalorder %s40, %s43
      %p49 = scmp.eq.s32.totalorder %s18, 0
      %p50 = por %p48, %p49
      %p51 = scmp.ne.s32.totalorder %s40, %s43
      %p52 = scmp.eq.s32.totalorder %s23, 1
      %p53 = por %p51, %p52
      %p54 = scmp.ne.s32.totalorder %s43, %s44
      %p55 = scmp.eq.s32.totalorder %s23, 0
      %p56 = por %p54, %p55
      %p57 = scmp.ne.s32.totalorder %s43, %s44
      %p58 = scmp.eq.s32.totalorder %s24, 1
      %p59 = por %p57, %p58
      %p61 = scmp.ne.s32.totalorder %s44, %s60
      %p62 = scmp.eq.s32.totalorder %s24, 0
      %p63 = por %p61, %p62
      %s64 = ssub.s32 %s26, %s33
      %p65 = scmp.eq.s32.totalorder %s64, 0
      %s67 = sadd.s32 %s66, 1
      %s68 = scalar_select %p65, %s66, %s67
      %p71 = pneg %p65
      %p72 = scmp.eq.s32.totalorder %s18, 1
      %p73 = por %p71, %p72
      %p74 = scmp.ne.s32.totalorder %s66, %s69
      %p75 = scmp.eq.s32.totalorder %s18, 0
      %p76 = por %p74, %p75
      %p77 = scmp.ne.s32.totalorder %s66, %s69
      %p78 = scmp.eq.s32.totalorder %s23, 1
      %p79 = por %p77, %p78
      %p80 = scmp.ne.s32.totalorder %s69, %s70
      %p81 = scmp.eq.s32.totalorder %s23, 0
      %p82 = por %p80, %p81
      %p83 = scmp.ne.s32.totalorder %s69, %s70
      %p84 = scmp.eq.s32.totalorder %s24, 1
      %p85 = por %p83, %p84
      %p87 = scmp.ne.s32.totalorder %s70, %s86
      %p88 = scmp.eq.s32.totalorder %s24, 0
      %p89 = por %p87, %p88
      %s90 = ssub.s32 %s26, %s33
      %p91 = scmp.eq.s32.totalorder %s90, 0
      %s93 = sadd.s32 %s92, 1
      %s94 = scalar_select %p91, %s92, %s93
      %p97 = pneg %p91
      %p98 = scmp.eq.s32.totalorder %s18, 1
      %p99 = por %p97, %p98
      %p100 = scmp.ne.s32.totalorder %s92, %s95
      %p101 = scmp.eq.s32.totalorder %s18, 0
      %p102 = por %p100, %p101
      %p103 = scmp.ne.s32.totalorder %s92, %s95
      %p104 = scmp.eq.s32.totalorder %s23, 1
      %p105 = por %p103, %p104
      %p106 = scmp.ne.s32.totalorder %s95, %s96
      %p107 = scmp.eq.s32.totalorder %s23, 0
      %p108 = por %p106, %p107
      %p109 = scmp.ne.s32.totalorder %s95, %s96
      %p110 = scmp.eq.s32.totalorder %s24, 1
      %p111 = por %p109, %p110
      %p113 = scmp.ne.s32.totalorder %s96, %s112
      %p114 = scmp.eq.s32.totalorder %s24, 0
      %p115 = por %p113, %p114
      %s116 = ssub.s32 %s26, %s33
      %p117 = scmp.eq.s32.totalorder %s116, 0
      %s119 = sadd.s32 %s118, 1
      %s120 = scalar_select %p117, %s118, %s119
      %p123 = pneg %p117
      %p124 = scmp.eq.s32.totalorder %s18, 1
      %p125 = por %p123, %p124
      %p126 = scmp.ne.s32.totalorder %s118, %s121
      %p127 = scmp.eq.s32.totalorder %s18, 0
      %p128 = por %p126, %p127
      %p129 = scmp.ne.s32.totalorder %s118, %s121
      %p130 = scmp.eq.s32.totalorder %s23, 1
      %p131 = por %p129, %p130
      %p132 = scmp.ne.s32.totalorder %s121, %s122
      %p133 = scmp.eq.s32.totalorder %s23, 0
      %p134 = por %p132, %p133
      %p135 = scmp.ne.s32.totalorder %s121, %s122
      %p136 = scmp.eq.s32.totalorder %s24, 1
      %p137 = por %p135, %p136
      %p139 = scmp.ne.s32.totalorder %s122, %s138
      %p140 = scmp.eq.s32.totalorder %s24, 0
      %p141 = por %p139, %p140
      %s143 = sadd.s32 %s142, 1
      %p146 = scmp.eq.s32.totalorder %s18, 1
      %p147 = scmp.ne.s32.totalorder %s142, %s144
      %p148 = scmp.eq.s32.totalorder %s18, 0
      %p149 = por %p147, %p148
      %p150 = scmp.ne.s32.totalorder %s142, %s144
      %p151 = scmp.eq.s32.totalorder %s23, 1
      %p152 = por %p150, %p151
      %p153 = scmp.ne.s32.totalorder %s144, %s145
      %p154 = scmp.eq.s32.totalorder %s23, 0
      %p155 = por %p153, %p154
      %p156 = scmp.ne.s32.totalorder %s144, %s145
      %p157 = scmp.eq.s32.totalorder %s24, 1
      %p158 = por %p156, %p157
      %p160 = scmp.ne.s32.totalorder %s145, %s159
      %p161 = scmp.eq.s32.totalorder %s24, 0
      %p162 = por %p160, %p161
      %s163 = ssub.s32 %s25, %s37
      %p164 = scmp.eq.s32.totalorder %s163, 0
      %s166 = sadd.s32 %s165, 1
      %s167 = scalar_select %p164, %s165, %s166
      %p170 = pneg %p164
      %p171 = scmp.eq.s32.totalorder %s18, 1
      %p172 = por %p170, %p171
      %p173 = scmp.ne.s32.totalorder %s165, %s168
      %p174 = scmp.eq.s32.totalorder %s18, 0
      %p175 = por %p173, %p174
      %p176 = scmp.ne.s32.totalorder %s165, %s168
      %p177 = scmp.eq.s32.totalorder %s23, 1
      %p178 = por %p176, %p177
      %p179 = scmp.ne.s32.totalorder %s168, %s169
      %p180 = scmp.eq.s32.totalorder %s23, 0
      %p181 = por %p179, %p180
      %p182 = scmp.ne.s32.totalorder %s168, %s169
      %p183 = scmp.eq.s32.totalorder %s24, 1
      %p184 = por %p182, %p183
      %p186 = scmp.ne.s32.totalorder %s169, %s185
      %p187 = scmp.eq.s32.totalorder %s24, 0
      %p188 = por %p186, %p187
      %p189 = scmp.le.s32.totalorder 1, %s18
      %p190 = scmp.lt.s32.totalorder %s18, 3
      %p191 = pnand %p189, %p190
      %p192 = pneg %p191
      // Predicated region
      $region9: #{tpu_custom_call.1} parent=5 // pred_check
        _
      $region10: #{tpu_custom_call.1} parent=5 // pred_check_branch
        %194 = sbr.rel (%p191) target = $region12
      $region11: #{tpu_custom_call.1} parent=5 // pred_region
        %s195 = ssub.s32 %s18, 1
        // Predicated region
        $region13: #{tpu_custom_call.1} parent=11 // pred_check
          %p196 = pneg %p82
        $region14: #{tpu_custom_call.1} parent=11 // pred_check_branch
          %198 = sbr.rel (%p196) target = $region16
        $region15: #{tpu_custom_call.1} parent=11 // pred_region
          %s199 = smul.u32 2, %s28
          %s201 = ssub.s32 2048, 2048
          %202 = vsyncadd [#allocation7], %s201
          %s203 = smul.addr %s199, 64
          %s204 = scalar_lea.hbm %s1, %s203
          %s205 = sshll.u32 [#allocation6], 4
          %s206 = int_to_ptr.vmem [resolvable:$true] %s205
          %211 = dma.hbm_to_vmem [thread:$0]  %s204, 2048, %s206, [#allocation7], 128, 128, 8
        $region16: #{tpu_custom_call.1} parent=11 // pred_fallthru
          _
        // Predicated region
        $region17: #{tpu_custom_call.1} parent=11 // pred_check
          %p212 = pneg %p108
        $region18: #{tpu_custom_call.1} parent=11 // pred_check_branch
          %214 = sbr.rel (%p212) target = $region20
        $region19: #{tpu_custom_call.1} parent=11 // pred_region
          %s215 = smul.u32 2, %s28
          %p216 = scmp.lt.s32.totalorder %s215, 1
          %s217 = scalar_select %p216, %s215, 1
          %s218 = scalar_lea.vmem %s2, %s217
          %s219 = smul.u32 2, %s28
        $region20: #{tpu_custom_call.1} parent=11 // pred_fallthru
          _
        // Predicated region
        $region21: #{tpu_custom_call.1} parent=11 // pred_check
          %p220 = pneg %p134
        $region22: #{tpu_custom_call.1} parent=11 // pred_check_branch
          %222 = sbr.rel (%p220) target = $region24
        $region23: #{tpu_custom_call.1} parent=11 // pred_region
          %s223 = smul.u32 32, %s28
          %s225 = ssub.s32 2048, 2048
          %226 = vsyncadd [#allocation7], %s225
          %s227 = smul.addr %s223, 64
          %s228 = scalar_lea.hbm %s3, %s227
          %s229 = sshll.u32 [#allocation8], 4
          %s230 = int_to_ptr.vmem [resolvable:$true] %s229
          %235 = dma.hbm_to_vmem [thread:$0]  %s228, 2048, %s230, [#allocation7], 64, 64, 4
        $region24: #{tpu_custom_call.1} parent=11 // pred_fallthru
          _
        // Predicated region
        $region25: #{tpu_custom_call.1} parent=11 // pred_check
          %p236 = pneg %p155
        $region26: #{tpu_custom_call.1} parent=11 // pred_check_branch
          %238 = sbr.rel (%p236) target = $region28
        $region27: #{tpu_custom_call.1} parent=11 // pred_region
          _
        $region28: #{tpu_custom_call.1} parent=11 // pred_fallthru
          _
      $region12: #{tpu_custom_call.1} parent=5 // pred_fallthru
        _
      %p239 = scmp.lt.s32.totalorder %s18, 2
      // Predicated region
      $region29: #{tpu_custom_call.1} parent=5 // pred_check
        %p240 = pneg %p239
      $region30: #{tpu_custom_call.1} parent=5 // pred_check_branch
        %242 = sbr.rel (%p240) target = $region32
      $region31: #{tpu_custom_call.1} parent=5 // pred_region
        // Predicated region
        $region33: #{tpu_custom_call.1} parent=31 // pred_check
          %p243 = pneg %p50
        $region34: #{tpu_custom_call.1} parent=31 // pred_check_branch
          %245 = sbr.rel (%p243) target = $region36
        $region35: #{tpu_custom_call.1} parent=31 // pred_region
          %s246 = sand.u32 %s40, 1
          %s247 = scalar_lea.sflag [#allocation4], %s246
          %s248 = sand.u32 %s40, 1
          %s249 = smul.addr %s248, 32
          %s250 = scalar_lea.vmem [#allocation3], %s249
          %s251 = smul.u32 8, %s25
          %s253 = ssub.s32 512, 512
          %254 = vsyncadd %s247, %s253
          %s255 = smul.addr %s251, 64
          %s256 = scalar_lea.hbm %s0, %s255
          %s257 = sshll.u32 %s250, 4
          %s258 = int_to_ptr.vmem [resolvable:$true] %s257
          %263 = dma.hbm_to_vmem [thread:$0]  %s256, 512, %s258, %s247, 64, 64, 4
        $region36: #{tpu_custom_call.1} parent=31 // pred_fallthru
          _
      $region32: #{tpu_custom_call.1} parent=5 // pred_fallthru
        _
      %p264 = scmp.le.s32.totalorder 1, %s18
      %p265 = scmp.lt.s32.totalorder %s18, 3
      %p266 = pnand %p264, %p265
      %p267 = pneg %p266
      // Predicated region
      $region37: #{tpu_custom_call.1} parent=5 // pred_check
        _
      $region38: #{tpu_custom_call.1} parent=5 // pred_check_branch
        %269 = sbr.rel (%p266) target = $region40
      $region39: #{tpu_custom_call.1} parent=5 // pred_region
        %s270 = ssub.s32 %s18, 1
        %s271 = sand.u32 %s43, 1
        %s272 = scalar_lea.sflag [#allocation4], %s271
        %s273 = sand.u32 %s43, 1
        %s274 = smul.addr %s273, 32
        %s275 = scalar_lea.vmem [#allocation3], %s274
        // Predicated region
        $region41: #{tpu_custom_call.1} parent=39 // pred_check
          %p276 = pneg %p56
        $region42: #{tpu_custom_call.1} parent=39 // pred_check_branch
          %278 = sbr.rel (%p276) target = $region44
        $region43: #{tpu_custom_call.1} parent=39 // pred_region
          %279 = dma.done %s272, 512
        $region44: #{tpu_custom_call.1} parent=39 // pred_fallthru
          _
        // Predicated region
        $region45: #{tpu_custom_call.1} parent=39 // pred_check
          %p280 = pneg %p82
        $region46: #{tpu_custom_call.1} parent=39 // pred_check_branch
          %282 = sbr.rel (%p280) target = $region48
        $region47: #{tpu_custom_call.1} parent=39 // pred_region
          %283 = dma.done [#allocation7], 2048
        $region48: #{tpu_custom_call.1} parent=39 // pred_fallthru
          _
        // Predicated region
        $region49: #{tpu_custom_call.1} parent=39 // pred_check
          %p284 = pneg %p134
        $region50: #{tpu_custom_call.1} parent=39 // pred_check_branch
          %286 = sbr.rel (%p284) target = $region52
        $region51: #{tpu_custom_call.1} parent=39 // pred_region
          %287 = dma.done [#allocation7], 2048
        $region52: #{tpu_custom_call.1} parent=39 // pred_fallthru
          _
        %s288 = sand.u32 %s43, 1
        %s289 = scalar_lea.sflag [#allocation4], %s288
        %s290 = sand.u32 %s43, 1
        %s291 = smul.addr %s290, 32
        %s292 = scalar_lea.vmem [#allocation3], %s291
        %p293 = pneg %p56
        %p294 = pneg %p53
        %p295 = pneg %p82
        %p296 = pneg %p79
        %s297 = smul.u32 2, %s28
        %p298 = scmp.lt.s32.totalorder %s297, 1
        %s299 = scalar_select %p298, %s297, 1
        %s300 = scalar_lea.vmem %s2, %s299
        %p301 = pneg %p108
        %p302 = pneg %p105
        %p303 = pneg %p134
        %p304 = pneg %p131
        %p305 = pneg %p155
        %p306 = pneg %p152
        %p307 = pneg %p181
        %p308 = pneg %p178
        %s309 = sand.u32 %s168, 1
        %s310 = scalar_lea.sflag [#allocation5], %s309
        %s311 = sand.u32 %s168, 1
        %s312 = smul.addr %s311, 64
        %s313 = scalar_lea.vmem [#allocation9], %s312
        %s314 = smul.u32 8, %s27
        %s315 = smul.u32 2, %s28
        %s316 = smul.u32 2, %s28
        %p317 = scmp.lt.s32.totalorder %s316, 1
        %s318 = scalar_select %p317, %s316, 1
        %s319 = scalar_lea.vmem %s2, %s318
        %s320 = smul.u32 2, %s28
        %s321 = smul.u32 32, %s28
        %s322 = smul.u32 8, %s27
        %p324 = scmp.eq.s32.totalorder %s28, 0
        // Predicated region
        $region53: #{tpu_custom_call.1} parent=39 // pred_check
          %p325 = pneg %p324
        $region54: #{tpu_custom_call.1} parent=39 // pred_check_branch
          %327 = sbr.rel (%p325) target = $region56
        $region55: #{tpu_custom_call.1} parent=39 // pred_region
          %328 = vst [vmem:[#allocation2] sm:$0xff] 0.0
          %329 = vst [vmem:[#allocation2 + $0x8] sm:$0xff] 0.0
          %330 = vst [vmem:[#allocation2 + $0x10] sm:$0xff] 0.0
          %331 = vst [vmem:[#allocation2 + $0x18] sm:$0xff] 0.0
          %332 = vst [vmem:[#allocation2 + $0x20] sm:$0xff] 0.0
          %333 = vst [vmem:[#allocation2 + $0x28] sm:$0xff] 0.0
          %334 = vst [vmem:[#allocation2 + $0x30] sm:$0xff] 0.0
          %335 = vst [vmem:[#allocation2 + $0x38] sm:$0xff] 0.0
        $region56: #{tpu_custom_call.1} parent=39 // pred_fallthru
          _
        %v336 = vld [vmem:[%s275] sm:$0xf]
        %v337 = vld [vmem:[%s275 + $0x4] sm:$0xf]
        %v338 = vld [vmem:[%s275 + $0x8] sm:$0xf]
        %v339 = vld [vmem:[%s275 + $0xc] sm:$0xf]
        %v340 = vld [vmem:[%s275 + $0x10] sm:$0xf]
        %v341 = vld [vmem:[%s275 + $0x14] sm:$0xf]
        %v342 = vld [vmem:[%s275 + $0x18] sm:$0xf]
        %v343 = vld [vmem:[%s275 + $0x1c] sm:$0xf]
        %v344 = vld [vmem:[#allocation6] sm:$0xff]
        %v345 = vld [vmem:[#allocation6 + $0x8] sm:$0xff]
        %v346 = vld [vmem:[#allocation6 + $0x10] sm:$0xff]
        %v347 = vld [vmem:[#allocation6 + $0x18] sm:$0xff]
        %v348 = vld [vmem:[#allocation6 + $0x20] sm:$0xff]
        %v349 = vld [vmem:[#allocation6 + $0x28] sm:$0xff]
        %v350 = vld [vmem:[#allocation6 + $0x30] sm:$0xff]
        %v351 = vld [vmem:[#allocation6 + $0x38] sm:$0xff]
        %v352 = vld [vmem:[#allocation6 + $0x40] sm:$0xff]
        %v353 = vld [vmem:[#allocation6 + $0x48] sm:$0xff]
        %v354 = vld [vmem:[#allocation6 + $0x50] sm:$0xff]
        %v355 = vld [vmem:[#allocation6 + $0x58] sm:$0xff]
        %v356 = vld [vmem:[#allocation6 + $0x60] sm:$0xff]
        %v357 = vld [vmem:[#allocation6 + $0x68] sm:$0xff]
        %v358 = vld [vmem:[#allocation6 + $0x70] sm:$0xff]
        %v359 = vld [vmem:[#allocation6 + $0x78] sm:$0xff]
        %v360 = vld [vmem:[%s319] sm:$0x3]
        %v362 = vlaneseq
        %v363 = vshrl.u32 %v362, 7
        %v364 = vsub.s32 0, %v363
        %v365 = vrot.slane %v360, %v364
        %v366 = vlaneseq
        %v367 = vshrl.u32 %v366, 7
        %v368 = vsub.s32 1, %v367
        %v369 = vrot.slane %v360, %v368
        %v380 = vunpack.c.l.b16 %v336
        %v381 = vunpack.c.l.b16 %v337
        %v382 = vunpack.c.l.b16 %v338
        %v383 = vunpack.c.l.b16 %v339
        %v384 = vunpack.c.l.b16 %v340
        %v385 = vunpack.c.l.b16 %v341
        %v386 = vunpack.c.l.b16 %v342
        %v387 = vunpack.c.l.b16 %v343
        %v388 = vpack.c.b16 %v381, %v380
        %v389 = vpack.c.b16 %v383, %v382
        %v390 = vpack.c.b16 %v385, %v384
        %v391 = vpack.c.b16 %v387, %v386
        %v412 = vunpack.c.l.b16 %v344
        %v413 = vunpack.c.h.b16 %v344
        %v414 = vunpack.c.l.b16 %v345
        %v415 = vunpack.c.h.b16 %v345
        %v416 = vunpack.c.l.b16 %v346
        %v417 = vunpack.c.h.b16 %v346
        %v418 = vunpack.c.l.b16 %v347
        %v419 = vunpack.c.h.b16 %v347
        %v420 = vunpack.c.l.b16 %v348
        %v421 = vunpack.c.h.b16 %v348
        %v422 = vunpack.c.l.b16 %v349
        %v423 = vunpack.c.h.b16 %v349
        %v424 = vunpack.c.l.b16 %v350
        %v425 = vunpack.c.h.b16 %v350
        %v426 = vunpack.c.l.b16 %v351
        %v427 = vunpack.c.h.b16 %v351
        %v428 = vunpack.c.l.b16 %v352
        %v429 = vunpack.c.h.b16 %v352
        %v430 = vunpack.c.l.b16 %v353
        %v431 = vunpack.c.h.b16 %v353
        %v432 = vunpack.c.l.b16 %v354
        %v433 = vunpack.c.h.b16 %v354
        %v434 = vunpack.c.l.b16 %v355
        %v435 = vunpack.c.h.b16 %v355
        %v436 = vunpack.c.l.b16 %v356
        %v437 = vunpack.c.h.b16 %v356
        %v438 = vunpack.c.l.b16 %v357
        %v439 = vunpack.c.h.b16 %v357
        %v440 = vunpack.c.l.b16 %v358
        %v441 = vunpack.c.h.b16 %v358
        %v442 = vunpack.c.l.b16 %v359
        %v443 = vunpack.c.h.b16 %v359
        %v444 = vpack.c.b16 %v414, %v412
        %v445 = vpack.c.b16 %v415, %v413
        %v446 = vpack.c.b16 %v418, %v416
        %v447 = vpack.c.b16 %v419, %v417
        %v448 = vpack.c.b16 %v422, %v420
        %v449 = vpack.c.b16 %v423, %v421
        %v450 = vpack.c.b16 %v426, %v424
        %v451 = vpack.c.b16 %v427, %v425
        %v452 = vpack.c.b16 %v430, %v428
        %v453 = vpack.c.b16 %v431, %v429
        %v454 = vpack.c.b16 %v434, %v432
        %v455 = vpack.c.b16 %v435, %v433
        %v456 = vpack.c.b16 %v438, %v436
        %v457 = vpack.c.b16 %v439, %v437
        %v458 = vpack.c.b16 %v442, %v440
        %v459 = vpack.c.b16 %v443, %v441
        %476 = vmatprep.subr.bf16.mxu0 %v445
        %477 = vmatpush1.bf16.msra.mxu0 %v444
        %478 = vmatprep.subr.bf16.mxu0 %v447
        %479 = vmatpush1.bf16.msra.mxu0 %v446
        %480 = vmatprep.subr.bf16.mxu0 %v449
        %481 = vmatpush1.bf16.msra.mxu0 %v448
        %482 = vmatprep.subr.bf16.mxu0 %v451
        %483 = vmatpush1.bf16.msra.mxu0 %v450
        %484 = vmatprep.subr.bf16.mxu0 %v453
        %485 = vmatpush1.bf16.msra.mxu0 %v452
        %486 = vmatprep.subr.bf16.mxu0 %v455
        %487 = vmatpush1.bf16.msra.mxu0 %v454
        %488 = vmatprep.subr.bf16.mxu0 %v457
        %489 = vmatpush1.bf16.msra.mxu0 %v456
        %490 = vmatprep.subr.bf16.mxu0 %v459
        %491 = vmatpush1.bf16.msra.mxu0 %v458
        %492 = vmatprep.subr.bf16.mxu0 0
        %493 = vmatpush1.bf16.msra.mxu0 0
        %494 = vmatprep.subr.bf16.mxu0 0
        %495 = vmatpush1.bf16.msra.mxu0 0
        %496 = vmatprep.subr.bf16.mxu0 0
        %497 = vmatpush1.bf16.msra.mxu0 0
        %498 = vmatprep.subr.bf16.mxu0 0
        %499 = vmatpush1.bf16.msra.mxu0 0
        %500 = vmatprep.subr.bf16.mxu0 0
        %501 = vmatpush1.bf16.msra.mxu0 0
        %502 = vmatprep.subr.bf16.mxu0 0
        %503 = vmatpush1.bf16.msra.mxu0 0
        %504 = vmatprep.subr.bf16.mxu0 0
        %505 = vmatpush1.bf16.msra.mxu0 0
        %506 = vmatprep.subr.bf16.mxu0 0
        %507 = vmatpush1.bf16.msra.mxu0 0
        %508 = vmatprep.mubr.bf16.mxu0 0
        %509 = vmatmul.mubr.bf16.gmra.mrb[0].mxu0 %v388
        %v510 = vpop.f32.mrb[0].mxu0
        %v511 = vadd.f32 %v365, %v510
        %v512 = vpop.f32.mrb[0].mxu0
        %v513 = vadd.f32 %v369, %v512
        %v514 = vpop.f32.mrb[0].mxu0
        %v515 = vadd.f32 %v365, %v514
        %v516 = vpop.f32.mrb[0].mxu0
        %v517 = vadd.f32 %v369, %v516
        %518 = vmatprep.mubr.bf16.mxu0 0
        %519 = vmatmul.mubr.bf16.gmra.mrb[0].mxu0 %v389
        %v520 = vpop.f32.mrb[0].mxu0
        %v521 = vadd.f32 %v365, %v520
        %v522 = vpop.f32.mrb[0].mxu0
        %v523 = vadd.f32 %v369, %v522
        %v524 = vpop.f32.mrb[0].mxu0
        %v525 = vadd.f32 %v365, %v524
        %v526 = vpop.f32.mrb[0].mxu0
        %v527 = vadd.f32 %v369, %v526
        %528 = vmatprep.mubr.bf16.mxu0 0
        %529 = vmatmul.mubr.bf16.gmra.mrb[0].mxu0 %v390
        %v530 = vpop.f32.mrb[0].mxu0
        %v531 = vadd.f32 %v365, %v530
        %v532 = vpop.f32.mrb[0].mxu0
        %v533 = vadd.f32 %v369, %v532
        %v534 = vpop.f32.mrb[0].mxu0
        %v535 = vadd.f32 %v365, %v534
        %v536 = vpop.f32.mrb[0].mxu0
        %v537 = vadd.f32 %v369, %v536
        %538 = vmatprep.mubr.bf16.mxu0 0
        %539 = vmatmul.mubr.bf16.gmra.mrb[0].mxu0 %v391
        %v540 = vpop.f32.mrb[0].mxu0
        %v541 = vadd.f32 %v365, %v540
        %v542 = vpop.f32.mrb[0].mxu0
        %v543 = vadd.f32 %v369, %v542
        %v544 = vpop.f32.mrb[0].mxu0
        %v545 = vadd.f32 %v365, %v544
        %v546 = vpop.f32.mrb[0].mxu0
        %v547 = vadd.f32 %v369, %v546
        %548 = vdwg.mxu0
        %v549 = vxor.u32 %v511, 2147483648
        %v550 = vxor.u32 %v513, 2147483648
        %v551 = vxor.u32 %v515, 2147483648
        %v552 = vxor.u32 %v517, 2147483648
        %v553 = vxor.u32 %v521, 2147483648
        %v554 = vxor.u32 %v523, 2147483648
        %v555 = vxor.u32 %v525, 2147483648
        %v556 = vxor.u32 %v527, 2147483648
        %v557 = vxor.u32 %v531, 2147483648
        %v558 = vxor.u32 %v533, 2147483648
        %v559 = vxor.u32 %v535, 2147483648
        %v560 = vxor.u32 %v537, 2147483648
        %v561 = vxor.u32 %v541, 2147483648
        %v562 = vxor.u32 %v543, 2147483648
        %v563 = vxor.u32 %v545, 2147483648
        %v564 = vxor.u32 %v547, 2147483648
        %v565 = vmul.f32 %v549, 1.442695
        %v566 = vpow.pop %v565
        %v567 = vmul.f32 %v550, 1.442695
        %v568 = vpow.pop %v567
        %v569 = vmul.f32 %v551, 1.442695
        %v570 = vpow.pop %v569
        %v571 = vmul.f32 %v552, 1.442695
        %v572 = vpow.pop %v571
        %v573 = vmul.f32 %v553, 1.442695
        %v574 = vpow.pop %v573
        %v575 = vmul.f32 %v554, 1.442695
        %v576 = vpow.pop %v575
        %v577 = vmul.f32 %v555, 1.442695
        %v578 = vpow.pop %v577
        %v579 = vmul.f32 %v556, 1.442695
        %v580 = vpow.pop %v579
        %v581 = vmul.f32 %v557, 1.442695
        %v582 = vpow.pop %v581
        %v583 = vmul.f32 %v558, 1.442695
        %v584 = vpow.pop %v583
        %v585 = vmul.f32 %v559, 1.442695
        %v586 = vpow.pop %v585
        %v587 = vmul.f32 %v560, 1.442695
        %v588 = vpow.pop %v587
        %v589 = vmul.f32 %v561, 1.442695
        %v590 = vpow.pop %v589
        %v591 = vmul.f32 %v562, 1.442695
        %v592 = vpow.pop %v591
        %v593 = vmul.f32 %v563, 1.442695
        %v594 = vpow.pop %v593
        %v595 = vmul.f32 %v564, 1.442695
        %v596 = vpow.pop %v595
        %v597 = vadd.f32 %v566, 1.0
        %v598 = vadd.f32 %v568, 1.0
        %v599 = vadd.f32 %v570, 1.0
        %v600 = vadd.f32 %v572, 1.0
        %v601 = vadd.f32 %v574, 1.0
        %v602 = vadd.f32 %v576, 1.0
        %v603 = vadd.f32 %v578, 1.0
        %v604 = vadd.f32 %v580, 1.0
        %v605 = vadd.f32 %v582, 1.0
        %v606 = vadd.f32 %v584, 1.0
        %v607 = vadd.f32 %v586, 1.0
        %v608 = vadd.f32 %v588, 1.0
        %v609 = vadd.f32 %v590, 1.0
        %v610 = vadd.f32 %v592, 1.0
        %v611 = vadd.f32 %v594, 1.0
        %v612 = vadd.f32 %v596, 1.0
        %v613 = vrcp.pop %v597
        %v614 = vmul.f32 1.0, %v613
        %v615 = vrcp.pop %v598
        %v616 = vmul.f32 1.0, %v615
        %v617 = vrcp.pop %v599
        %v618 = vmul.f32 1.0, %v617
        %v619 = vrcp.pop %v600
        %v620 = vmul.f32 1.0, %v619
        %v621 = vrcp.pop %v601
        %v622 = vmul.f32 1.0, %v621
        %v623 = vrcp.pop %v602
        %v624 = vmul.f32 1.0, %v623
        %v625 = vrcp.pop %v603
        %v626 = vmul.f32 1.0, %v625
        %v627 = vrcp.pop %v604
        %v628 = vmul.f32 1.0, %v627
        %v629 = vrcp.pop %v605
        %v630 = vmul.f32 1.0, %v629
        %v631 = vrcp.pop %v606
        %v632 = vmul.f32 1.0, %v631
        %v633 = vrcp.pop %v607
        %v634 = vmul.f32 1.0, %v633
        %v635 = vrcp.pop %v608
        %v636 = vmul.f32 1.0, %v635
        %v637 = vrcp.pop %v609
        %v638 = vmul.f32 1.0, %v637
        %v639 = vrcp.pop %v610
        %v640 = vmul.f32 1.0, %v639
        %v641 = vrcp.pop %v611
        %v642 = vmul.f32 1.0, %v641
        %v643 = vrcp.pop %v612
        %v644 = vmul.f32 1.0, %v643
        %v645 = vmul.f32 %v511, %v614
        %v646 = vmul.f32 %v513, %v616
        %v647 = vmul.f32 %v515, %v618
        %v648 = vmul.f32 %v517, %v620
        %v649 = vmul.f32 %v521, %v622
        %v650 = vmul.f32 %v523, %v624
        %v651 = vmul.f32 %v525, %v626
        %v652 = vmul.f32 %v527, %v628
        %v653 = vmul.f32 %v531, %v630
        %v654 = vmul.f32 %v533, %v632
        %v655 = vmul.f32 %v535, %v634
        %v656 = vmul.f32 %v537, %v636
        %v657 = vmul.f32 %v541, %v638
        %v658 = vmul.f32 %v543, %v640
        %v659 = vmul.f32 %v545, %v642
        %v660 = vmul.f32 %v547, %v644
        %v661 = vpack.c.bf16 %v647, %v645
        %v662 = vpack.c.bf16 %v648, %v646
        %v663 = vpack.c.bf16 %v651, %v649
        %v664 = vpack.c.bf16 %v652, %v650
        %v665 = vpack.c.bf16 %v655, %v653
        %v666 = vpack.c.bf16 %v656, %v654
        %v667 = vpack.c.bf16 %v659, %v657
        %v668 = vpack.c.bf16 %v660, %v658
        %v669 = vld [vmem:[#allocation2] sm:$0xff]
        %v670 = vld [vmem:[#allocation2 + $0x8] sm:$0xff]
        %v671 = vld [vmem:[#allocation2 + $0x10] sm:$0xff]
        %v672 = vld [vmem:[#allocation2 + $0x18] sm:$0xff]
        %v673 = vld [vmem:[#allocation2 + $0x20] sm:$0xff]
        %v674 = vld [vmem:[#allocation2 + $0x28] sm:$0xff]
        %v675 = vld [vmem:[#allocation2 + $0x30] sm:$0xff]
        %v676 = vld [vmem:[#allocation2 + $0x38] sm:$0xff]
        %v677 = vld [vmem:[#allocation8] sm:$0xf]
        %v678 = vld [vmem:[#allocation8 + $0x4] sm:$0xf]
        %v679 = vld [vmem:[#allocation8 + $0x8] sm:$0xf]
        %v680 = vld [vmem:[#allocation8 + $0xc] sm:$0xf]
        %v681 = vld [vmem:[#allocation8 + $0x10] sm:$0xf]
        %v682 = vld [vmem:[#allocation8 + $0x14] sm:$0xf]
        %v683 = vld [vmem:[#allocation8 + $0x18] sm:$0xf]
        %v684 = vld [vmem:[#allocation8 + $0x1c] sm:$0xf]
        %v685 = vld [vmem:[#allocation8 + $0x20] sm:$0xf]
        %v686 = vld [vmem:[#allocation8 + $0x24] sm:$0xf]
        %v687 = vld [vmem:[#allocation8 + $0x28] sm:$0xf]
        %v688 = vld [vmem:[#allocation8 + $0x2c] sm:$0xf]
        %v689 = vld [vmem:[#allocation8 + $0x30] sm:$0xf]
        %v690 = vld [vmem:[#allocation8 + $0x34] sm:$0xf]
        %v691 = vld [vmem:[#allocation8 + $0x38] sm:$0xf]
        %v692 = vld [vmem:[#allocation8 + $0x3c] sm:$0xf]
        %v693 = vld [vmem:[#allocation8 + $0x40] sm:$0xf]
        %v694 = vld [vmem:[#allocation8 + $0x44] sm:$0xf]
        %v695 = vld [vmem:[#allocation8 + $0x48] sm:$0xf]
        %v696 = vld [vmem:[#allocation8 + $0x4c] sm:$0xf]
        %v697 = vld [vmem:[#allocation8 + $0x50] sm:$0xf]
        %v698 = vld [vmem:[#allocation8 + $0x54] sm:$0xf]
        %v699 = vld [vmem:[#allocation8 + $0x58] sm:$0xf]
        %v700 = vld [vmem:[#allocation8 + $0x5c] sm:$0xf]
        %v701 = vld [vmem:[#allocation8 + $0x60] sm:$0xf]
        %v702 = vld [vmem:[#allocation8 + $0x64] sm:$0xf]
        %v703 = vld [vmem:[#allocation8 + $0x68] sm:$0xf]
        %v704 = vld [vmem:[#allocation8 + $0x6c] sm:$0xf]
        %v705 = vld [vmem:[#allocation8 + $0x70] sm:$0xf]
        %v706 = vld [vmem:[#allocation8 + $0x74] sm:$0xf]
        %v707 = vld [vmem:[#allocation8 + $0x78] sm:$0xf]
        %v708 = vld [vmem:[#allocation8 + $0x7c] sm:$0xf]
        %v741 = vunpack.c.l.b16 %v677
        %v742 = vunpack.c.l.b16 %v678
        %v743 = vunpack.c.l.b16 %v679
        %v744 = vunpack.c.l.b16 %v680
        %v745 = vunpack.c.l.b16 %v681
        %v746 = vunpack.c.l.b16 %v682
        %v747 = vunpack.c.l.b16 %v683
        %v748 = vunpack.c.l.b16 %v684
        %v749 = vunpack.c.l.b16 %v685
        %v750 = vunpack.c.l.b16 %v686
        %v751 = vunpack.c.l.b16 %v687
        %v752 = vunpack.c.l.b16 %v688
        %v753 = vunpack.c.l.b16 %v689
        %v754 = vunpack.c.l.b16 %v690
        %v755 = vunpack.c.l.b16 %v691
        %v756 = vunpack.c.l.b16 %v692
        %v757 = vunpack.c.l.b16 %v693
        %v758 = vunpack.c.l.b16 %v694
        %v759 = vunpack.c.l.b16 %v695
        %v760 = vunpack.c.l.b16 %v696
        %v761 = vunpack.c.l.b16 %v697
        %v762 = vunpack.c.l.b16 %v698
        %v763 = vunpack.c.l.b16 %v699
        %v764 = vunpack.c.l.b16 %v700
        %v765 = vunpack.c.l.b16 %v701
        %v766 = vunpack.c.l.b16 %v702
        %v767 = vunpack.c.l.b16 %v703
        %v768 = vunpack.c.l.b16 %v704
        %v769 = vunpack.c.l.b16 %v705
        %v770 = vunpack.c.l.b16 %v706
        %v771 = vunpack.c.l.b16 %v707
        %v772 = vunpack.c.l.b16 %v708
        %v773 = vpack.c.b16 %v742, %v741
        %v774 = vpack.c.b16 %v744, %v743
        %v775 = vpack.c.b16 %v746, %v745
        %v776 = vpack.c.b16 %v748, %v747
        %v777 = vpack.c.b16 %v750, %v749
        %v778 = vpack.c.b16 %v752, %v751
        %v779 = vpack.c.b16 %v754, %v753
        %v780 = vpack.c.b16 %v756, %v755
        %v781 = vpack.c.b16 %v758, %v757
        %v782 = vpack.c.b16 %v760, %v759
        %v783 = vpack.c.b16 %v762, %v761
        %v784 = vpack.c.b16 %v764, %v763
        %v785 = vpack.c.b16 %v766, %v765
        %v786 = vpack.c.b16 %v768, %v767
        %v787 = vpack.c.b16 %v770, %v769
        %v788 = vpack.c.b16 %v772, %v771
        %805 = vmatprep.subr.bf16.mxu0 0
        %806 = vmatpush1.bf16.msra.mxu0 %v773
        %807 = vmatprep.subr.bf16.mxu0 0
        %808 = vmatpush1.bf16.msra.mxu0 %v774
        %809 = vmatprep.subr.bf16.mxu0 0
        %810 = vmatpush1.bf16.msra.mxu0 %v775
        %811 = vmatprep.subr.bf16.mxu0 0
        %812 = vmatpush1.bf16.msra.mxu0 %v776
        %813 = vmatprep.subr.bf16.mxu0 0
        %814 = vmatpush1.bf16.msra.mxu0 %v777
        %815 = vmatprep.subr.bf16.mxu0 0
        %816 = vmatpush1.bf16.msra.mxu0 %v778
        %817 = vmatprep.subr.bf16.mxu0 0
        %818 = vmatpush1.bf16.msra.mxu0 %v779
        %819 = vmatprep.subr.bf16.mxu0 0
        %820 = vmatpush1.bf16.msra.mxu0 %v780
        %821 = vmatprep.subr.bf16.mxu0 0
        %822 = vmatpush1.bf16.msra.mxu0 %v781
        %823 = vmatprep.subr.bf16.mxu0 0
        %824 = vmatpush1.bf16.msra.mxu0 %v782
        %825 = vmatprep.subr.bf16.mxu0 0
        %826 = vmatpush1.bf16.msra.mxu0 %v783
        %827 = vmatprep.subr.bf16.mxu0 0
        %828 = vmatpush1.bf16.msra.mxu0 %v784
        %829 = vmatprep.subr.bf16.mxu0 0
        %830 = vmatpush1.bf16.msra.mxu0 %v785
        %831 = vmatprep.subr.bf16.mxu0 0
        %832 = vmatpush1.bf16.msra.mxu0 %v786
        %833 = vmatprep.subr.bf16.mxu0 0
        %834 = vmatpush1.bf16.msra.mxu0 %v787
        %835 = vmatprep.subr.bf16.mxu0 0
        %836 = vmatpush1.bf16.msra.mxu0 %v788
        %837 = vmatprep.mubr.bf16.mxu0 %v662
        %838 = vmatmul.mubr.bf16.gmra.mrb[0].mxu0 %v661
        %v839 = vpop.f32.mrb[0].mxu0
        %v840 = vadd.f32 0.0, %v839
        %v841 = vpop.f32.mrb[0].mxu0
        %v842 = vpop.f32.mrb[0].mxu0
        %v843 = vadd.f32 0.0, %v842
        %v844 = vpop.f32.mrb[0].mxu0
        %845 = vmatprep.mubr.bf16.mxu0 %v664
        %846 = vmatmul.mubr.bf16.gmra.mrb[0].mxu0 %v663
        %v847 = vpop.f32.mrb[0].mxu0
        %v848 = vadd.f32 0.0, %v847
        %v849 = vpop.f32.mrb[0].mxu0
        %v850 = vpop.f32.mrb[0].mxu0
        %v851 = vadd.f32 0.0, %v850
        %v852 = vpop.f32.mrb[0].mxu0
        %853 = vmatprep.mubr.bf16.mxu0 %v666
        %854 = vmatmul.mubr.bf16.gmra.mrb[0].mxu0 %v665
        %v855 = vpop.f32.mrb[0].mxu0
        %v856 = vadd.f32 0.0, %v855
        %v857 = vpop.f32.mrb[0].mxu0
        %v858 = vpop.f32.mrb[0].mxu0
        %v859 = vadd.f32 0.0, %v858
        %v860 = vpop.f32.mrb[0].mxu0
        %861 = vmatprep.mubr.bf16.mxu0 %v668
        %862 = vmatmul.mubr.bf16.gmra.mrb[0].mxu0 %v667
        %v863 = vpop.f32.mrb[0].mxu0
        %v864 = vadd.f32 0.0, %v863
        %v865 = vpop.f32.mrb[0].mxu0
        %v866 = vpop.f32.mrb[0].mxu0
        %v867 = vadd.f32 0.0, %v866
        %v868 = vpop.f32.mrb[0].mxu0
        %869 = vdwg.mxu0
        %v870 = vadd.f32 %v669, %v840
        %v871 = vadd.f32 %v670, %v843
        %v872 = vadd.f32 %v671, %v848
        %v873 = vadd.f32 %v672, %v851
        %v874 = vadd.f32 %v673, %v856
        %v875 = vadd.f32 %v674, %v859
        %v876 = vadd.f32 %v675, %v864
        %v877 = vadd.f32 %v676, %v867
        %878 = vst [vmem:[#allocation2] sm:$0xff] %v870
        %879 = vst [vmem:[#allocation2 + $0x8] sm:$0xff] %v871
        %880 = vst [vmem:[#allocation2 + $0x10] sm:$0xff] %v872
        %881 = vst [vmem:[#allocation2 + $0x18] sm:$0xff] %v873
        %882 = vst [vmem:[#allocation2 + $0x20] sm:$0xff] %v874
        %883 = vst [vmem:[#allocation2 + $0x28] sm:$0xff] %v875
        %884 = vst [vmem:[#allocation2 + $0x30] sm:$0xff] %v876
        %885 = vst [vmem:[#allocation2 + $0x38] sm:$0xff] %v877
        // Predicated region
        $region57: #{tpu_custom_call.1} parent=39 // pred_check
          %p886 = pneg %p324
        $region58: #{tpu_custom_call.1} parent=39 // pred_check_branch
          %888 = sbr.rel (%p886) target = $region60
        $region59: #{tpu_custom_call.1} parent=39 // pred_region
          %v889 = vld [vmem:[#allocation2] sm:$0xff]
          %v890 = vld [vmem:[#allocation2 + $0x8] sm:$0xff]
          %v891 = vld [vmem:[#allocation2 + $0x10] sm:$0xff]
          %v892 = vld [vmem:[#allocation2 + $0x18] sm:$0xff]
          %v893 = vld [vmem:[#allocation2 + $0x20] sm:$0xff]
          %v894 = vld [vmem:[#allocation2 + $0x28] sm:$0xff]
          %v895 = vld [vmem:[#allocation2 + $0x30] sm:$0xff]
          %v896 = vld [vmem:[#allocation2 + $0x38] sm:$0xff]
          %v897 = vld [vmem:[%s4] sm:$0x1]
          %v899 = vlaneseq
          %v900 = vshrl.u32 %v899, 7
          %v901 = vsub.s32 0, %v900
          %v902 = vrot.slane %v897, %v901
          %v904 = vadd.f32 %v889, %v902
          %v905 = vadd.f32 %v890, %v902
          %v906 = vadd.f32 %v891, %v902
          %v907 = vadd.f32 %v892, %v902
          %v908 = vadd.f32 %v893, %v902
          %v909 = vadd.f32 %v894, %v902
          %v910 = vadd.f32 %v895, %v902
          %v911 = vadd.f32 %v896, %v902
          %912 = vst [vmem:[%s313] sm:$0xff] %v904
          %913 = vst [vmem:[%s313 + $0x8] sm:$0xff] %v905
          %914 = vst [vmem:[%s313 + $0x10] sm:$0xff] %v906
          %915 = vst [vmem:[%s313 + $0x18] sm:$0xff] %v907
          %916 = vst [vmem:[%s313 + $0x20] sm:$0xff] %v908
          %917 = vst [vmem:[%s313 + $0x28] sm:$0xff] %v909
          %918 = vst [vmem:[%s313 + $0x30] sm:$0xff] %v910
          %919 = vst [vmem:[%s313 + $0x38] sm:$0xff] %v911
        $region60: #{tpu_custom_call.1} parent=39 // pred_fallthru
          _
        %s920 = sand.u32 %s168, 1
        %s921 = scalar_lea.sflag [#allocation5], %s920
        %s922 = sand.u32 %s168, 1
        %s923 = smul.addr %s922, 64
        %s924 = scalar_lea.vmem [#allocation9], %s923
        // Predicated region
        $region61: #{tpu_custom_call.1} parent=39 // pred_check
          %p925 = pneg %p178
        $region62: #{tpu_custom_call.1} parent=39 // pred_check_branch
          %927 = sbr.rel (%p925) target = $region64
        $region63: #{tpu_custom_call.1} parent=39 // pred_region
          %s928 = smul.u32 8, %s27
          %s930 = ssub.s32 1024, 1024
          %931 = vsyncadd %s921, %s930
          %s932 = smul.addr %s928, 128
          %s933 = scalar_lea.hbm %s5, %s932
          %s934 = sshll.u32 %s924, 4
          %s935 = int_to_ptr.vmem [resolvable:$true] %s934
          %940 = dma.vmem_to_hbm [thread:$0]  %s935, 1024, %s933, %s921, 128, 128, 8
        $region64: #{tpu_custom_call.1} parent=39 // pred_fallthru
          _
      $region40: #{tpu_custom_call.1} parent=5 // pred_fallthru
        _
      %p941 = scmp.le.s32.totalorder 2, %s18
      // Predicated region
      $region65: #{tpu_custom_call.1} parent=5 // pred_check
        %p942 = pneg %p941
      $region66: #{tpu_custom_call.1} parent=5 // pred_check_branch
        %944 = sbr.rel (%p942) target = $region68
      $region67: #{tpu_custom_call.1} parent=5 // pred_region
        %s945 = ssub.s32 %s18, 2
        // Predicated region
        $region69: #{tpu_custom_call.1} parent=67 // pred_check
          %p946 = pneg %p184
        $region70: #{tpu_custom_call.1} parent=67 // pred_check_branch
          %948 = sbr.rel (%p946) target = $region72
        $region71: #{tpu_custom_call.1} parent=67 // pred_region
          %s949 = sand.u32 %s169, 1
          %s950 = scalar_lea.sflag [#allocation5], %s949
          %s951 = sand.u32 %s169, 1
          %s952 = smul.addr %s951, 64
          %s953 = scalar_lea.vmem [#allocation9], %s952
          %954 = dma.done %s950, 1024
        $region72: #{tpu_custom_call.1} parent=67 // pred_fallthru
          _
      $region68: #{tpu_custom_call.1} parent=5 // pred_fallthru
        _
    $region6: #{tpu_custom_call.1} parent=1 // loop_footer
      %s22 = sadd.s32 1, %s18
    $region7: #{tpu_custom_call.1} parent=1 // loop_footer_branch
      %17 = sbr.rel target = $region3
    $region8: #{tpu_custom_call.1} parent=1 // loop_exit
      _
    %955 = vsyncpa [#allocation4], 1
    %s956 = scalar_lea.sflag [#allocation4], 1
    %957 = vsyncpa %s956, 1
    %958 = vsyncpa [#allocation7], 1
    %959 = vsyncpa [#allocation5], 1
    %s960 = scalar_lea.sflag [#allocation5], 1
    %961 = vsyncpa %s960, 1

</llo_original>
